<compile_context>
chip_gen: v5e
topology: v5e:2x2
jax: 0.10.0
libtpu: 0.0.40
codegen_flags: <defaults>
</compile_context>

<pallas_src>
import functools
import math

import jax
import jax.numpy as jnp
from jax.experimental import pallas as pl
from jax.experimental.pallas import tpu as pltpu


EPSILON = 1e-8  # args.epsilon


def _sum_all(x):
    """Full reduction that stays 2-D: (TM, B) -> (1, 1)."""
    return jnp.sum(jnp.sum(x, axis=1, keepdims=True), axis=0, keepdims=True)


def _cmpm_tile_kernel(img_ref, txt_ref, labc_ref, labr_ref, out_ref,
                      *, tm, eps, log_eps):
    t = pl.program_id(0)
    r0 = pl.multiple_of(t * tm, tm)

    # ---- Full-batch row normalization (needed as the RHS of both matmuls).
    # Recomputed per tile: O(B*D) VPU work vs O(TM*B*D) MXU work per tile, so
    # it is negligible and keeps every grid step independent (megacore-safe).
    img = img_ref[...]                                   # (B, D) f32
    txt = txt_ref[...]                                   # (B, D) f32
    img_ss = jnp.sum(img * img, axis=1, keepdims=True)   # (B, 1)
    txt_ss = jnp.sum(txt * txt, axis=1, keepdims=True)
    img_n_full = (img * jax.lax.rsqrt(img_ss)).astype(jnp.bfloat16)
    txt_n_full = (txt * jax.lax.rsqrt(txt_ss)).astype(jnp.bfloat16)

    # ---- This grid step's row tile.
    img_t = img_ref[pl.ds(r0, tm), :]                    # (TM, D)
    txt_t = txt_ref[pl.ds(r0, tm), :]
    img_ss_t = jnp.sum(img_t * img_t, axis=1, keepdims=True)
    txt_ss_t = jnp.sum(txt_t * txt_t, axis=1, keepdims=True)
    img_r_t = jax.lax.rsqrt(img_ss_t)
    txt_r_t = jax.lax.rsqrt(txt_ss_t)
    img_n_t = (img_t * img_r_t).astype(jnp.bfloat16)
    txt_n_t = (txt_t * txt_r_t).astype(jnp.bfloat16)
    img_len_t = img_ss_t * img_r_t                       # ||img_i||  (TM, 1)
    txt_len_t = txt_ss_t * txt_r_t                       # ||txt_i||  (TM, 1)

    # ---- Two bf16 matmuls with f32 accumulation (row stripes of B x B mats).
    dims = (((1,), (1,)), ((), ()))
    sim_t = jax.lax.dot_general(img_n_t, txt_n_full, dims,
                                preferred_element_type=jnp.float32)   # (TM, B)
    tpi_base_t = jax.lax.dot_general(txt_n_t, img_n_full, dims,
                                     preferred_element_type=jnp.float32)
    # image_proj_text / text_proj_image logits via cheap VPU row scaling.
    ipt_t = img_len_t * sim_t
    tpi_t = txt_len_t * tpi_base_t

    # ---- Label mask for this tile + global per-column counts.
    lab_col = labc_ref[...]                              # (B, 1) i32
    lab_row = labr_ref[...]                              # (1, B) i32
    mask_t = labc_ref[pl.ds(r0, tm), :] == lab_row       # (TM, B) bool
    mask_t_f = mask_t.astype(jnp.float32)

    # labels_mask_norm[:, j] divides by ||mask row j|| = sqrt(count(label_j));
    # symmetric mask => column counts give the same norms.  log of the
    # normalized mask has only B+1 distinct values: B logs + a select.
    colsum = jnp.sum((lab_col == lab_row).astype(jnp.float32),
                     axis=0, keepdims=True)              # (1, B)
    log_col = jnp.log(jax.lax.rsqrt(colsum) + eps)       # (1, B)
    log_mask_t = jnp.where(mask_t, log_col, jnp.float32(log_eps))

    def _kl_row_sum(x):
        # sum( softmax(x) * (log_softmax(x) - log_mask) ), reusing exp(z).
        m = jnp.max(x, axis=1, keepdims=True)
        z = x - m
        e = jnp.exp(z)
        s = jnp.sum(e, axis=1, keepdims=True)
        logsm = z - jnp.log(s)
        pred = e * pl.reciprocal(s)                      # exact; only TM recips
        return _sum_all(pred * (logsm - log_mask_t))     # (1, 1)

    i2t_sum = _kl_row_sum(ipt_t)
    t2i_sum = _kl_row_sum(tpi_t)

    pos_sum = _sum_all(jnp.where(mask_t, sim_t, 0.0))    # (1, 1)
    sim_sum = _sum_all(sim_t)
    npos_sum = _sum_all(mask_t_f)

    # ---- Lane-dense per-tile partials: one (8, 128) block per grid step.
    lane = jax.lax.broadcasted_iota(jnp.int32, (8, 128), 1)
    row = (jnp.where(lane == 0, i2t_sum, 0.0)
           + jnp.where(lane == 1, t2i_sum, 0.0)
           + jnp.where(lane == 2, pos_sum, 0.0)
           + jnp.where(lane == 3, sim_sum, 0.0)
           + jnp.where(lane == 4, npos_sum, 0.0))
    out_ref[...] = row


def _pick_tm(batch):
    for tm in (256, 128, 64, 32, 16, 8):
        if batch % tm == 0:
            return tm
    return batch  # odd / tiny batch: a single row tile


def cmpm_loss_pallas(image_embeddings, text_embeddings, labels,
                     epsilon=EPSILON):
    """image_embeddings, text_embeddings: (B, D) f32 ; labels: (B,) int."""
    img = image_embeddings.astype(jnp.float32)
    txt = text_embeddings.astype(jnp.float32)
    B, D = img.shape

    # Lane-dense feature axis: zero-pad D to a multiple of 128 (no-op for
    # norms and dot products, full vreg / MXU contraction utilization).
    if D % 128 != 0:
        pad = 128 - (D % 128)
        img = jnp.pad(img, ((0, 0), (0, pad)))
        txt = jnp.pad(txt, ((0, 0), (0, pad)))
        D = D + pad

    lab = labels.astype(jnp.int32)
    lab_col = lab.reshape(B, 1)
    lab_row = lab.reshape(1, B)

    tm = _pick_tm(B)
    num_tiles = B // tm

    kernel = functools.partial(_cmpm_tile_kernel, tm=tm,
                               eps=float(epsilon),
                               log_eps=float(math.log(epsilon)))

    partials = pl.pallas_call(
        kernel,
        out_shape=jax.ShapeDtypeStruct((num_tiles * 8, 128), jnp.float32),
        grid=(num_tiles,),
        in_specs=[
            pl.BlockSpec((B, D), lambda i: (0, 0)),   # img, VMEM-resident
            pl.BlockSpec((B, D), lambda i: (0, 0)),   # txt, VMEM-resident
            pl.BlockSpec((B, 1), lambda i: (0, 0)),   # labels as column
            pl.BlockSpec((1, B), lambda i: (0, 0)),   # labels as row
        ],
        out_specs=pl.BlockSpec((8, 128), lambda i: (i, 0)),
        compiler_params=pltpu.CompilerParams(
            dimension_semantics=("parallel",),        # v7x: tiles across 2 TCs
            vmem_limit_bytes=64 * 1024 * 1024,        # raise v5e's 16 MiB default
        ),
    )(img, txt, lab_col, lab_row)

    # Tiny cross-tile reduction + final combine (a dozen scalar ops).
    totals = jnp.sum(partials.reshape(num_tiles, 8, 128)[:, 0, :], axis=0)
    i2t_total, t2i_total = totals[0], totals[1]
    pos_total, sim_total, n_pos = totals[2], totals[3], totals[4]

    bf = jnp.float32(B)
    cmpm_loss = (i2t_total + t2i_total) / bf
    pos_avg = pos_total / n_pos                      # n_pos >= B (diagonal)
    n_neg = bf * bf - n_pos
    # torch.mean of an empty selection is NaN; reproduce that faithfully
    # without dividing by zero.
    neg_avg = jnp.where(n_neg > 0,
                        (sim_total - pos_total) / jnp.maximum(n_neg, 1.0),
                        jnp.float32(jnp.nan))
    return cmpm_loss, pos_avg, neg_avg


class LossPallas:
    """JAX/Pallas equivalent of the PyTorch Loss module (CMPM branch)."""

    def __init__(self, feature_size, num_images, epsilon=EPSILON, key=None):
        self.CMPM = True
        self.epsilon = epsilon
        self.num_images = num_images
        # TODO(synk): args.resume checkpoint loading of W not implemented
        # (no file I/O in-script); W is unused by forward() anyway.
        key = jax.random.PRNGKey(42) if key is None else key
        limit = math.sqrt(6.0 / (feature_size + num_images))
        self.W = jax.random.uniform(key, (feature_size, num_images),
                                    minval=-limit, maxval=limit,
                                    dtype=jnp.float32)

    def __call__(self, image_embeddings, text_embeddings, labels):
        if self.CMPM:
            return cmpm_loss_pallas(image_embeddings, text_embeddings, labels,
                                    epsilon=self.epsilon)
        return (jnp.float32(0.0), jnp.float32(0.0), jnp.float32(0.0))


def _reference_jax(img, txt, labels, eps=EPSILON, bf16_matmul=False):
    """Pure-JAX CMPM.  bf16_matmul=True mirrors the kernel's MXU precision."""
    B = img.shape[0]
    lab = labels.astype(jnp.int32).reshape(B, 1)
    mask_f = (lab == lab.T).astype(jnp.float32)
    img_len = jnp.linalg.norm(img, axis=1, keepdims=True)
    txt_len = jnp.linalg.norm(txt, axis=1, keepdims=True)
    img_n = img / img_len
    txt_n = txt / txt_len
    if bf16_matmul:
        i_nm = img_n.astype(jnp.bfloat16)
        t_nm = txt_n.astype(jnp.bfloat16)
        sim = jnp.dot(i_nm, t_nm.T, preferred_element_type=jnp.float32)
        ipt = img_len * sim
        tpi = txt_len * sim.T
    else:
        sim = img_n @ txt_n.T
        ipt = img @ txt_n.T
        tpi = txt @ img_n.T
    mask_norm = mask_f / jnp.linalg.norm(mask_f, axis=1)   # broadcasts over cols
    log_mask = jnp.log(mask_norm + eps)
    i2t = jax.nn.softmax(ipt, 1) * (jax.nn.log_softmax(ipt, 1) - log_mask)
    t2i = jax.nn.softmax(tpi, 1) * (jax.nn.log_softmax(tpi, 1) - log_mask)
    loss = jnp.mean(jnp.sum(i2t, 1)) + jnp.mean(jnp.sum(t2i, 1))
    pos = jnp.sum(sim * mask_f) / jnp.sum(mask_f)
    neg = jnp.sum(sim * (1.0 - mask_f)) / jnp.sum(1.0 - mask_f)
    return loss, pos, neg


if __name__ == "__main__":
    B, D = 8, 32  # batch, feature_size
    key = jax.random.PRNGKey(0)
    k1, k2, k3 = jax.random.split(key, 3)
    img = jax.random.normal(k1, (B, D), dtype=jnp.float32)
    txt = jax.random.normal(k2, (B, D), dtype=jnp.float32)
    labels = jnp.array([0, 0, 1, 1, 2, 2, 3, 3], dtype=jnp.int32)

    loss_mod = LossPallas(feature_size=D, num_images=B, key=k3)
    cmpm_loss, pos_avg, neg_avg = loss_mod(img, txt, labels)
    jax.block_until_ready((cmpm_loss, pos_avg, neg_avg))

    # Tight check vs a reference using the same matmul precision (bf16
    # operands, f32 accumulation) — validates the kernel math exactly.
    ref_m = _reference_jax(img, txt, labels, bf16_matmul=True)
    assert jnp.allclose(cmpm_loss, ref_m[0], rtol=5e-3, atol=5e-3)
    assert jnp.allclose(pos_avg, ref_m[1], rtol=1e-3, atol=1e-3)
    assert jnp.allclose(neg_avg, ref_m[2], rtol=1e-3, atol=1e-3)

    # Coarse check vs the full-f32 PyTorch-equivalent math — documents that
    # the bf16 MXU trade-off stays well within a percent-level band.
    ref_f = _reference_jax(img, txt, labels, bf16_matmul=False)
    assert jnp.allclose(cmpm_loss, ref_f[0], rtol=2e-2, atol=2e-2)
    assert jnp.allclose(pos_avg, ref_f[1], rtol=1e-2, atol=5e-3)
    assert jnp.allclose(neg_avg, ref_f[2], rtol=1e-2, atol=5e-3)

    print("KERNEL_OK")
</pallas_src>

<mosaic_0001>
module attributes {stable_mosaic.version = 11 : i64} {
  func.func @_cmpm_tile_kernel(%arg0: i32, %arg1: memref<8x128xf32, #tpu.memory_space<vmem>>, %arg2: memref<8x128xf32, #tpu.memory_space<vmem>>, %arg3: memref<8x1xi32, #tpu.memory_space<vmem>>, %arg4: memref<1x8xi32, #tpu.memory_space<vmem>>, %arg5: memref<8x128xf32, #tpu.memory_space<vmem>>) attributes {dimension_semantics = [#tpu.dimension_semantics<parallel>], iteration_bounds = array<i64: 1>, scalar_prefetch = 0 : i64, scratch_operands = 0 : i64, tpu.core_type = #tpu.core_type<tc>, window_params = [{pipeline_mode = #tpu.pipeline_mode<synchronous>, transform_indices = @transform_0, window_bounds = array<i64: 8, 128>}, {pipeline_mode = #tpu.pipeline_mode<synchronous>, transform_indices = @transform_1, window_bounds = array<i64: 8, 128>}, {pipeline_mode = #tpu.pipeline_mode<synchronous>, transform_indices = @transform_2, window_bounds = array<i64: 8, 1>}, {pipeline_mode = #tpu.pipeline_mode<synchronous>, transform_indices = @transform_3, window_bounds = array<i64: 1, 8>}, {transform_indices = @transform_4, window_bounds = array<i64: 8, 128>}]} {
    %c8_i32 = arith.constant 8 : i32
    %0 = arith.muli %arg0, %c8_i32 : i32
    %1 = tpu.assume_multiple %0, 8 : i32
    %c0 = arith.constant 0 : index
    %c0_0 = arith.constant 0 : index
    %2 = vector.load %arg1[%c0, %c0_0] : memref<8x128xf32, #tpu.memory_space<vmem>>, vector<8x128xf32>
    %c0_1 = arith.constant 0 : index
    %c0_2 = arith.constant 0 : index
    %3 = vector.load %arg2[%c0_1, %c0_2] : memref<8x128xf32, #tpu.memory_space<vmem>>, vector<8x128xf32>
    %4 = arith.mulf %2, %2 : vector<8x128xf32>
    %cst = arith.constant dense<0.000000e+00> : vector<8xf32>
    %5 = vector.multi_reduction <add>, %4, %cst [1] : vector<8x128xf32> to vector<8xf32>
    %6 = vector.shape_cast %5 : vector<8xf32> to vector<8x1xf32>
    %7 = arith.mulf %3, %3 : vector<8x128xf32>
    %cst_3 = arith.constant dense<0.000000e+00> : vector<8xf32>
    %8 = vector.multi_reduction <add>, %7, %cst_3 [1] : vector<8x128xf32> to vector<8xf32>
    %9 = vector.shape_cast %8 : vector<8xf32> to vector<8x1xf32>
    %10 = math.rsqrt %6 : vector<8x1xf32>
    %11 = vector.broadcast %10 : vector<8x1xf32> to vector<8x128xf32>
    %12 = arith.mulf %2, %11 : vector<8x128xf32>
    %13 = arith.truncf %12 : vector<8x128xf32> to vector<8x128xbf16>
    %14 = math.rsqrt %9 : vector<8x1xf32>
    %15 = vector.broadcast %14 : vector<8x1xf32> to vector<8x128xf32>
    %16 = arith.mulf %3, %15 : vector<8x128xf32>
    %17 = arith.truncf %16 : vector<8x128xf32> to vector<8x128xbf16>
    %18 = arith.index_cast %1 : i32 to index
    %c0_4 = arith.constant 0 : index
    %19 = vector.load %arg1[%18, %c0_4] : memref<8x128xf32, #tpu.memory_space<vmem>>, vector<8x128xf32>
    %20 = arith.index_cast %1 : i32 to index
    %c0_5 = arith.constant 0 : index
    %21 = vector.load %arg2[%20, %c0_5] : memref<8x128xf32, #tpu.memory_space<vmem>>, vector<8x128xf32>
    %22 = arith.mulf %19, %19 : vector<8x128xf32>
    %cst_6 = arith.constant dense<0.000000e+00> : vector<8xf32>
    %23 = vector.multi_reduction <add>, %22, %cst_6 [1] : vector<8x128xf32> to vector<8xf32>
    %24 = vector.shape_cast %23 : vector<8xf32> to vector<8x1xf32>
    %25 = arith.mulf %21, %21 : vector<8x128xf32>
    %cst_7 = arith.constant dense<0.000000e+00> : vector<8xf32>
    %26 = vector.multi_reduction <add>, %25, %cst_7 [1] : vector<8x128xf32> to vector<8xf32>
    %27 = vector.shape_cast %26 : vector<8xf32> to vector<8x1xf32>
    %28 = math.rsqrt %24 : vector<8x1xf32>
    %29 = math.rsqrt %27 : vector<8x1xf32>
    %30 = vector.broadcast %28 : vector<8x1xf32> to vector<8x128xf32>
    %31 = arith.mulf %19, %30 : vector<8x128xf32>
    %32 = arith.truncf %31 : vector<8x128xf32> to vector<8x128xbf16>
    %33 = vector.broadcast %29 : vector<8x1xf32> to vector<8x128xf32>
    %34 = arith.mulf %21, %33 : vector<8x128xf32>
    %35 = arith.truncf %34 : vector<8x128xf32> to vector<8x128xbf16>
    %36 = arith.mulf %24, %28 : vector<8x1xf32>
    %37 = arith.mulf %27, %29 : vector<8x1xf32>
    %cst_8 = arith.constant dense<0.000000e+00> : vector<8x8xf32>
    %38 = tpu.matmul %32, %17, %cst_8 {dimension_numbers = #tpu.dot_dimension_numbers<[1], [1], [0], [0], [0, 0, 1, 0], [], []>} : vector<8x128xbf16>, vector<8x128xbf16>, vector<8x8xf32> -> vector<8x8xf32>
    %cst_9 = arith.constant dense<0.000000e+00> : vector<8x8xf32>
    %39 = tpu.matmul %35, %13, %cst_9 {dimension_numbers = #tpu.dot_dimension_numbers<[1], [1], [0], [0], [0, 0, 1, 0], [], []>} : vector<8x128xbf16>, vector<8x128xbf16>, vector<8x8xf32> -> vector<8x8xf32>
    %40 = vector.broadcast %36 : vector<8x1xf32> to vector<8x8xf32>
    %41 = arith.mulf %40, %38 : vector<8x8xf32>
    %42 = vector.broadcast %37 : vector<8x1xf32> to vector<8x8xf32>
    %43 = arith.mulf %42, %39 : vector<8x8xf32>
    %c0_10 = arith.constant 0 : index
    %c0_11 = arith.constant 0 : index
    %44 = vector.load %arg3[%c0_10, %c0_11] : memref<8x1xi32, #tpu.memory_space<vmem>>, vector<8x1xi32>
    %c0_12 = arith.constant 0 : index
    %c0_13 = arith.constant 0 : index
    %45 = vector.load %arg4[%c0_12, %c0_13] : memref<1x8xi32, #tpu.memory_space<vmem>>, vector<1x8xi32>
    %46 = arith.index_cast %1 : i32 to index
    %c0_14 = arith.constant 0 : index
    %47 = vector.load %arg3[%46, %c0_14] : memref<8x1xi32, #tpu.memory_space<vmem>>, vector<8x1xi32>
    %48 = vector.broadcast %47 : vector<8x1xi32> to vector<8x8xi32>
    %49 = vector.broadcast %45 : vector<1x8xi32> to vector<8x8xi32>
    %50 = arith.cmpi eq, %48, %49 : vector<8x8xi32>
    %51 = arith.extui %50 : vector<8x8xi1> to vector<8x8xi32>
    %52 = arith.sitofp %51 : vector<8x8xi32> to vector<8x8xf32>
    %53 = vector.broadcast %44 : vector<8x1xi32> to vector<8x8xi32>
    %54 = vector.broadcast %45 : vector<1x8xi32> to vector<8x8xi32>
    %55 = arith.cmpi eq, %53, %54 : vector<8x8xi32>
    %56 = arith.extui %55 : vector<8x8xi1> to vector<8x8xi32>
    %57 = arith.sitofp %56 : vector<8x8xi32> to vector<8x8xf32>
    %cst_15 = arith.constant dense<0.000000e+00> : vector<8xf32>
    %58 = vector.multi_reduction <add>, %57, %cst_15 [0] : vector<8x8xf32> to vector<8xf32>
    %59 = vector.shape_cast %58 : vector<8xf32> to vector<1x8xf32>
    %60 = math.rsqrt %59 : vector<1x8xf32>
    %cst_16 = arith.constant 9.99999993E-9 : f32
    %61 = vector.broadcast %cst_16 : f32 to vector<1x8xf32>
    %62 = arith.addf %60, %61 : vector<1x8xf32>
    %63 = math.log %62 : vector<1x8xf32>
    %cst_17 = arith.constant -18.420681 : f32
    %64 = vector.shape_cast %63 : vector<1x8xf32> to vector<1x8xf32>
    %65 = vector.broadcast %64 : vector<1x8xf32> to vector<8x8xf32>
    %66 = vector.broadcast %cst_17 : f32 to vector<8x8xf32>
    %67 = arith.select %50, %65, %66 : vector<8x8xi1>, vector<8x8xf32>
    %cst_18 = arith.constant dense<0xFF800000> : vector<8xf32>
    %68 = vector.multi_reduction <maximumf>, %41, %cst_18 [1] : vector<8x8xf32> to vector<8xf32>
    %69 = vector.shape_cast %68 : vector<8xf32> to vector<8x1xf32>
    %70 = vector.broadcast %69 : vector<8x1xf32> to vector<8x8xf32>
    %71 = arith.subf %41, %70 : vector<8x8xf32>
    %72 = math.exp %71 : vector<8x8xf32>
    %cst_19 = arith.constant dense<0.000000e+00> : vector<8xf32>
    %73 = vector.multi_reduction <add>, %72, %cst_19 [1] : vector<8x8xf32> to vector<8xf32>
    %74 = vector.shape_cast %73 : vector<8xf32> to vector<8x1xf32>
    %75 = math.log %74 : vector<8x1xf32>
    %76 = vector.broadcast %75 : vector<8x1xf32> to vector<8x8xf32>
    %77 = arith.subf %71, %76 : vector<8x8xf32>
    %78 = tpu.reciprocal %74 : vector<8x1xf32> -> vector<8x1xf32>
    %79 = vector.broadcast %78 : vector<8x1xf32> to vector<8x8xf32>
    %80 = arith.mulf %72, %79 : vector<8x8xf32>
    %81 = arith.subf %77, %67 : vector<8x8xf32>
    %82 = arith.mulf %80, %81 : vector<8x8xf32>
    %cst_20 = arith.constant dense<0.000000e+00> : vector<8xf32>
    %83 = vector.multi_reduction <add>, %82, %cst_20 [1] : vector<8x8xf32> to vector<8xf32>
    %84 = vector.shape_cast %83 : vector<8xf32> to vector<8x1xf32>
    %cst_21 = arith.constant dense<0.000000e+00> : vector<1xf32>
    %85 = vector.multi_reduction <add>, %84, %cst_21 [0] : vector<8x1xf32> to vector<1xf32>
    %86 = vector.shape_cast %85 : vector<1xf32> to vector<1x1xf32>
    %cst_22 = arith.constant dense<0xFF800000> : vector<8xf32>
    %87 = vector.multi_reduction <maximumf>, %43, %cst_22 [1] : vector<8x8xf32> to vector<8xf32>
    %88 = vector.shape_cast %87 : vector<8xf32> to vector<8x1xf32>
    %89 = vector.broadcast %88 : vector<8x1xf32> to vector<8x8xf32>
    %90 = arith.subf %43, %89 : vector<8x8xf32>
    %91 = math.exp %90 : vector<8x8xf32>
    %cst_23 = arith.constant dense<0.000000e+00> : vector<8xf32>
    %92 = vector.multi_reduction <add>, %91, %cst_23 [1] : vector<8x8xf32> to vector<8xf32>
    %93 = vector.shape_cast %92 : vector<8xf32> to vector<8x1xf32>
    %94 = math.log %93 : vector<8x1xf32>
    %95 = vector.broadcast %94 : vector<8x1xf32> to vector<8x8xf32>
    %96 = arith.subf %90, %95 : vector<8x8xf32>
    %97 = tpu.reciprocal %93 : vector<8x1xf32> -> vector<8x1xf32>
    %98 = vector.broadcast %97 : vector<8x1xf32> to vector<8x8xf32>
    %99 = arith.mulf %91, %98 : vector<8x8xf32>
    %100 = arith.subf %96, %67 : vector<8x8xf32>
    %101 = arith.mulf %99, %100 : vector<8x8xf32>
    %cst_24 = arith.constant dense<0.000000e+00> : vector<8xf32>
    %102 = vector.multi_reduction <add>, %101, %cst_24 [1] : vector<8x8xf32> to vector<8xf32>
    %103 = vector.shape_cast %102 : vector<8xf32> to vector<8x1xf32>
    %cst_25 = arith.constant dense<0.000000e+00> : vector<1xf32>
    %104 = vector.multi_reduction <add>, %103, %cst_25 [0] : vector<8x1xf32> to vector<1xf32>
    %105 = vector.shape_cast %104 : vector<1xf32> to vector<1x1xf32>
    %cst_26 = arith.constant 0.000000e+00 : f32
    %106 = vector.broadcast %cst_26 : f32 to vector<8x8xf32>
    %107 = arith.select %50, %38, %106 : vector<8x8xi1>, vector<8x8xf32>
    %cst_27 = arith.constant dense<0.000000e+00> : vector<8xf32>
    %108 = vector.multi_reduction <add>, %107, %cst_27 [1] : vector<8x8xf32> to vector<8xf32>
    %109 = vector.shape_cast %108 : vector<8xf32> to vector<8x1xf32>
    %cst_28 = arith.constant dense<0.000000e+00> : vector<1xf32>
    %110 = vector.multi_reduction <add>, %109, %cst_28 [0] : vector<8x1xf32> to vector<1xf32>
    %111 = vector.shape_cast %110 : vector<1xf32> to vector<1x1xf32>
    %cst_29 = arith.constant dense<0.000000e+00> : vector<8xf32>
    %112 = vector.multi_reduction <add>, %38, %cst_29 [1] : vector<8x8xf32> to vector<8xf32>
    %113 = vector.shape_cast %112 : vector<8xf32> to vector<8x1xf32>
    %cst_30 = arith.constant dense<0.000000e+00> : vector<1xf32>
    %114 = vector.multi_reduction <add>, %113, %cst_30 [0] : vector<8x1xf32> to vector<1xf32>
    %115 = vector.shape_cast %114 : vector<1xf32> to vector<1x1xf32>
    %cst_31 = arith.constant dense<0.000000e+00> : vector<8xf32>
    %116 = vector.multi_reduction <add>, %52, %cst_31 [1] : vector<8x8xf32> to vector<8xf32>
    %117 = vector.shape_cast %116 : vector<8xf32> to vector<8x1xf32>
    %cst_32 = arith.constant dense<0.000000e+00> : vector<1xf32>
    %118 = vector.multi_reduction <add>, %117, %cst_32 [0] : vector<8x1xf32> to vector<1xf32>
    %119 = vector.shape_cast %118 : vector<1xf32> to vector<1x1xf32>
    %120 = tpu.iota {dimensions = array<i32: 1>} : vector<8x128xi32>
    %c0_i32 = arith.constant 0 : i32
    %121 = vector.broadcast %c0_i32 : i32 to vector<8x128xi32>
    %122 = arith.cmpi eq, %120, %121 : vector<8x128xi32>
    %cst_33 = arith.constant 0.000000e+00 : f32
    %123 = vector.shape_cast %86 : vector<1x1xf32> to vector<1x1xf32>
    %124 = vector.broadcast %123 : vector<1x1xf32> to vector<8x128xf32>
    %125 = vector.broadcast %cst_33 : f32 to vector<8x128xf32>
    %126 = arith.select %122, %124, %125 : vector<8x128xi1>, vector<8x128xf32>
    %c1_i32 = arith.constant 1 : i32
    %127 = vector.broadcast %c1_i32 : i32 to vector<8x128xi32>
    %128 = arith.cmpi eq, %120, %127 : vector<8x128xi32>
    %cst_34 = arith.constant 0.000000e+00 : f32
    %129 = vector.shape_cast %105 : vector<1x1xf32> to vector<1x1xf32>
    %130 = vector.broadcast %129 : vector<1x1xf32> to vector<8x128xf32>
    %131 = vector.broadcast %cst_34 : f32 to vector<8x128xf32>
    %132 = arith.select %128, %130, %131 : vector<8x128xi1>, vector<8x128xf32>
    %133 = arith.addf %126, %132 : vector<8x128xf32>
    %c2_i32 = arith.constant 2 : i32
    %134 = vector.broadcast %c2_i32 : i32 to vector<8x128xi32>
    %135 = arith.cmpi eq, %120, %134 : vector<8x128xi32>
    %cst_35 = arith.constant 0.000000e+00 : f32
    %136 = vector.shape_cast %111 : vector<1x1xf32> to vector<1x1xf32>
    %137 = vector.broadcast %136 : vector<1x1xf32> to vector<8x128xf32>
    %138 = vector.broadcast %cst_35 : f32 to vector<8x128xf32>
    %139 = arith.select %135, %137, %138 : vector<8x128xi1>, vector<8x128xf32>
    %140 = arith.addf %133, %139 : vector<8x128xf32>
    %c3_i32 = arith.constant 3 : i32
    %141 = vector.broadcast %c3_i32 : i32 to vector<8x128xi32>
    %142 = arith.cmpi eq, %120, %141 : vector<8x128xi32>
    %cst_36 = arith.constant 0.000000e+00 : f32
    %143 = vector.shape_cast %115 : vector<1x1xf32> to vector<1x1xf32>
    %144 = vector.broadcast %143 : vector<1x1xf32> to vector<8x128xf32>
    %145 = vector.broadcast %cst_36 : f32 to vector<8x128xf32>
    %146 = arith.select %142, %144, %145 : vector<8x128xi1>, vector<8x128xf32>
    %147 = arith.addf %140, %146 : vector<8x128xf32>
    %c4_i32 = arith.constant 4 : i32
    %148 = vector.broadcast %c4_i32 : i32 to vector<8x128xi32>
    %149 = arith.cmpi eq, %120, %148 : vector<8x128xi32>
    %cst_37 = arith.constant 0.000000e+00 : f32
    %150 = vector.shape_cast %119 : vector<1x1xf32> to vector<1x1xf32>
    %151 = vector.broadcast %150 : vector<1x1xf32> to vector<8x128xf32>
    %152 = vector.broadcast %cst_37 : f32 to vector<8x128xf32>
    %153 = arith.select %149, %151, %152 : vector<8x128xi1>, vector<8x128xf32>
    %154 = arith.addf %147, %153 : vector<8x128xf32>
    %c0_38 = arith.constant 0 : index
    %c0_39 = arith.constant 0 : index
    %155 = vector.load %arg5[%c0_38, %c0_39] : memref<8x128xf32, #tpu.memory_space<vmem>>, vector<8x128xf32>
    tpu.vector_store %arg5[%c0_38, %c0_39], %154 {strides = array<i32>} : memref<8x128xf32, #tpu.memory_space<vmem>>, vector<8x128xf32>,
    return
  }
  func.func @transform_0(%arg0: i32) -> (i32, i32) {
    %c0_i32 = arith.constant 0 : i32
    %c0_i32_0 = arith.constant 0 : i32
    %c0_i32_1 = arith.constant 0 : i32
    return %c0_i32, %c0_i32_0 : i32, i32
  }
  func.func @transform_1(%arg0: i32) -> (i32, i32) {
    %c0_i32 = arith.constant 0 : i32
    %c0_i32_0 = arith.constant 0 : i32
    %c0_i32_1 = arith.constant 0 : i32
    return %c0_i32, %c0_i32_0 : i32, i32
  }
  func.func @transform_2(%arg0: i32) -> (i32, i32) {
    %c0_i32 = arith.constant 0 : i32
    %c0_i32_0 = arith.constant 0 : i32
    %c0_i32_1 = arith.constant 0 : i32
    return %c0_i32, %c0_i32_0 : i32, i32
  }
  func.func @transform_3(%arg0: i32) -> (i32, i32) {
    %c0_i32 = arith.constant 0 : i32
    %c0_i32_0 = arith.constant 0 : i32
    %c0_i32_1 = arith.constant 0 : i32
    return %c0_i32, %c0_i32_0 : i32, i32
  }
  func.func @transform_4(%arg0: i32) -> (i32, i32) {
    %c0_i32 = arith.constant 0 : i32
    %c0_i32_0 = arith.constant 0 : i32
    return %arg0, %c0_i32 : i32, i32
  }
}

</mosaic_0001>

<llo_original>
// kernel: tpu_custom_call.1
$region0: #{tpu_custom_call.1}
  #allocation0 [shape = 'u32[]', space=smem, size = 0x4, offset = 0x4, fixed_abs, tag = 'smem constant byte address 0x4 - core index']
  #allocation1 [shape = 'u32[72,128]{1,0:T(1,128)}', space=vmem, size = 0x9000, scoped, tag = 'internal scratch']
  %s0 = inlined_call_operand.vmem [shape: f32[8,128], index: 0, kind: input, shape index: {}]
  %s1 = inlined_call_operand.hbm [shape: f32[8,128], index: 1, kind: input, shape index: {}]
  %s2 = inlined_call_operand.vmem [shape: s32[8,1], index: 2, kind: input, shape index: {}]
  %s3 = inlined_call_operand.vmem [shape: s32[1,8], index: 3, kind: input, shape index: {}]
  %s4 = inlined_call_operand.hbm [shape: f32[8,128], index: 4, kind: output, shape index: {}]
  %s5 = sld [smem:[#allocation0]]
  $region30: #{tpu_custom_call.1} parent=0
    _
  %s7 = ssub.s32 1, %s5
  %s8 = scalar_select 0, %s7, %s5
  $region1: #{tpu_custom_call.1} parent=0
    #allocation2 [shape = 'u8[4096]{0}', space=vmem, size = 0x1000, scoped, tag = 'input window, operand 1, single buffered']
    #allocation3 [shape = 's32[1]{0}', space=sflag, size = 0x4, scoped, tag = 'scoped memory for tpu_custom_call.1']
    #allocation4 [shape = 's32[1]{0}', space=sflag, size = 0x4, scoped, tag = 'scoped memory for tpu_custom_call.1']
    #allocation5 [shape = 'u8[4096]{0}', space=vmem, size = 0x1000, scoped, tag = 'output window, operand 0, single buffered']
    %9 = vsyncpa [#allocation3], 0
    %10 = vsyncpa [#allocation4], 0
    // Predicated region
    $region2: #{tpu_custom_call.1} parent=1 // pred_check
      _
    $region3: #{tpu_custom_call.1} parent=1 // pred_check_branch
      %12 = sbr.rel (0) target = $region5
    $region4: #{tpu_custom_call.1} parent=1 // pred_region
      _
    $region5: #{tpu_custom_call.1} parent=1 // pred_fallthru
      _
    // Predicated region
    $region6: #{tpu_custom_call.1} parent=1 // pred_check
      _
    $region7: #{tpu_custom_call.1} parent=1 // pred_check_branch
      %14 = sbr.rel (0) target = $region9
    $region8: #{tpu_custom_call.1} parent=1 // pred_region
      %16 = vsyncadd [#allocation3], 0
      %s18 = sshll.u32 %s1, 4
      %s19 = int_to_ptr.hbm [resolvable:$true] %s18
      %s20 = sshll.u32 [#allocation2], 4
      %s21 = int_to_ptr.vmem [resolvable:$true] %s20
      %23 = dma.hbm_to_vmem [thread:$0]  %s19, 128, %s21, [#allocation3]
    $region9: #{tpu_custom_call.1} parent=1 // pred_fallthru
      _
    // Predicated region
    $region10: #{tpu_custom_call.1} parent=1 // pred_check
      _
    $region11: #{tpu_custom_call.1} parent=1 // pred_check_branch
      %25 = sbr.rel (0) target = $region13
    $region12: #{tpu_custom_call.1} parent=1 // pred_region
      _
    $region13: #{tpu_custom_call.1} parent=1 // pred_fallthru
      _
    // Predicated region
    $region14: #{tpu_custom_call.1} parent=1 // pred_check
      _
    $region15: #{tpu_custom_call.1} parent=1 // pred_check_branch
      %27 = sbr.rel (0) target = $region17
    $region16: #{tpu_custom_call.1} parent=1 // pred_region
      _
    $region17: #{tpu_custom_call.1} parent=1 // pred_fallthru
      _
    // Predicated region
    $region18: #{tpu_custom_call.1} parent=1 // pred_check
      _
    $region19: #{tpu_custom_call.1} parent=1 // pred_check_branch
      %29 = sbr.rel (0) target = $region21
    $region20: #{tpu_custom_call.1} parent=1 // pred_region
      %31 = dma.done [#allocation3], 128
    $region21: #{tpu_custom_call.1} parent=1 // pred_fallthru
      _
    %s33 = smul.u32 0, 8
    %v34 = vld [vmem:[%s0] sm:$0xff]
    %v35 = vld [vmem:[#allocation2] sm:$0xff]
    %v36 = vmul.f32 %v34, %v34
    %37 = vadd.xlane.f32.xlu0 %v36
    %v38 = vpop.xlane.xlu0 %37
    %v39 = vmul.f32 %v35, %v35
    %40 = vadd.xlane.f32.xlu0 %v39
    %v41 = vpop.xlane.xlu0 %40
    %v42 = vrsqrt.pop %v38
    %v43 = vmul.f32 %v42, %v38
    %v44 = vmul.f32 %v43, %v42
    %v45 = vmul.f32 0.5, %v44
    %v46 = vsub.f32 1.5, %v45
    %v47 = vmul.f32 %v42, %v46
    %vm48 = vweird.f32 %v38
    %vm49 = vweird.f32 %v42
    %vm50 = vmor %vm48, %vm49
    %v51 = vsel %vm50, %v42, %v47
    %v52 = vmul.f32 %v34, %v51
    %v53 = vpack.c.bf16 %v52, %v52
    %v54 = vrsqrt.pop %v41
    %v55 = vmul.f32 %v54, %v41
    %v56 = vmul.f32 %v55, %v54
    %v57 = vmul.f32 0.5, %v56
    %v58 = vsub.f32 1.5, %v57
    %v59 = vmul.f32 %v54, %v58
    %vm60 = vweird.f32 %v41
    %vm61 = vweird.f32 %v54
    %vm62 = vmor %vm60, %vm61
    %v63 = vsel %vm62, %v54, %v59
    %v64 = vmul.f32 %v35, %v63
    %v65 = vpack.c.bf16 %v64, %v64
    %s66 = scalar_lea.vmem %s0, %s33
    %v67 = vld [vmem:[%s66] sm:$0xff]
    %s68 = scalar_lea.vmem [#allocation2], %s33
    %v69 = vld [vmem:[%s68] sm:$0xff]
    %v70 = vmul.f32 %v67, %v67
    %71 = vadd.xlane.f32.xlu0 %v70
    %v72 = vpop.xlane.xlu0 %71
    %v73 = vmul.f32 %v69, %v69
    %74 = vadd.xlane.f32.xlu0 %v73
    %v75 = vpop.xlane.xlu0 %74
    %v76 = vrsqrt.pop %v72
    %v77 = vmul.f32 %v76, %v72
    %v78 = vmul.f32 %v77, %v76
    %v79 = vmul.f32 0.5, %v78
    %v80 = vsub.f32 1.5, %v79
    %v81 = vmul.f32 %v76, %v80
    %vm82 = vweird.f32 %v72
    %vm83 = vweird.f32 %v76
    %vm84 = vmor %vm82, %vm83
    %v85 = vsel %vm84, %v76, %v81
    %v86 = vrsqrt.pop %v75
    %v87 = vmul.f32 %v86, %v75
    %v88 = vmul.f32 %v87, %v86
    %v89 = vmul.f32 0.5, %v88
    %v90 = vsub.f32 1.5, %v89
    %v91 = vmul.f32 %v86, %v90
    %vm92 = vweird.f32 %v75
    %vm93 = vweird.f32 %v86
    %vm94 = vmor %vm92, %vm93
    %v95 = vsel %vm94, %v86, %v91
    %v96 = vmul.f32 %v67, %v85
    %v97 = vpack.c.bf16 %v96, %v96
    %v98 = vmul.f32 %v69, %v95
    %v99 = vpack.c.bf16 %v98, %v98
    %v100 = vmul.f32 %v72, %v85
    %v101 = vmul.f32 %v75, %v95
    %102 = vmatpush.bf16.xpose.msra.mxu0 0
    %103 = vmatpush.bf16.xpose.msra.mxu0 0
    %104 = vmatpush.bf16.xpose.msra.mxu0 0
    %105 = vmatpush.bf16.xpose.msra.mxu0 0
    %106 = vmatpush.bf16.xpose.msra.mxu0 0
    %107 = vmatpush.bf16.xpose.msra.mxu0 0
    %108 = vmatpush.bf16.xpose.msra.mxu0 0
    %109 = vmatpush.bf16.xpose.msra.mxu0 %v65
    %110 = vmatmul.bf16.gmra.mxu0 %v97
    %v111 = vpop.f32.mrf.mxu0
    %v112 = vadd.f32 0.0, %v111
    %v113 = vpop.f32.mrf.mxu0
    %114 = vdwg.mxu0
    %115 = vmatpush.bf16.xpose.msra.mxu0 0
    %116 = vmatpush.bf16.xpose.msra.mxu0 0
    %117 = vmatpush.bf16.xpose.msra.mxu0 0
    %118 = vmatpush.bf16.xpose.msra.mxu0 0
    %119 = vmatpush.bf16.xpose.msra.mxu0 0
    %120 = vmatpush.bf16.xpose.msra.mxu0 0
    %121 = vmatpush.bf16.xpose.msra.mxu0 0
    %122 = vmatpush.bf16.xpose.msra.mxu0 %v53
    %123 = vmatmul.bf16.gmra.mxu0 %v99
    %v124 = vpop.f32.mrf.mxu0
    %v125 = vadd.f32 0.0, %v124
    %v126 = vpop.f32.mrf.mxu0
    %127 = vdwg.mxu0
    %v128 = vmul.f32 %v100, %v112
    %v129 = vmul.f32 %v101, %v125
    %v130 = vld [vmem:[%s2] sm:$0xff]
    %v131 = vld [vmem:[%s3] sm:$0x1]
    %s132 = scalar_lea.vmem %s2, %s33
    %v133 = vld [vmem:[%s132] sm:$0xff]
    %134 = vset.pattern.permute.xlu0 0
    %135 = vperm.xlu0 %134, %v133
    %v136 = vpop.permute.xlu0 %135
    %v137 = vperm.slane %v131, 0
    %vm138 = vcmp.eq.s32.totalorder %v136, %v137
    %v139 = vsel %vm138, 1, 0
    %v140 = vcvt.s32.f32 %v139
    %141 = vset.pattern.permute.xlu0 0
    %142 = vperm.xlu0 %141, %v130
    %v143 = vpop.permute.xlu0 %142
    %vm144 = vcmp.eq.s32.totalorder %v143, %v137
    %v145 = vsel %vm144, 1, 0
    %v146 = vcvt.s32.f32 %v145
    %vm147 = vcmask 64512
    %v148 = vsel %vm147, %v146, 0.0
    %v149 = vrot.slane %v148, 4
    %v150 = vadd.f32 %v148, %v149
    %v151 = vrot.slane %v150, 2
    %v152 = vadd.f32 %v150, %v151
    %v153 = vrot.slane %v152, 1
    %v154 = vadd.f32 %v152, %v153
    %v155 = vrsqrt.pop %v154
    %v156 = vmul.f32 %v155, %v154
    %v157 = vmul.f32 %v156, %v155
    %v158 = vmul.f32 0.5, %v157
    %v159 = vsub.f32 1.5, %v158
    %v160 = vmul.f32 %v155, %v159
    %vm161 = vweird.f32 %v154
    %vm162 = vweird.f32 %v155
    %vm163 = vmor %vm161, %vm162
    %v164 = vsel %vm163, %v155, %v160
    %v165 = vadd.f32 %v164, 1e-08
    %v166 = vlog2.pop %v165
    %v167 = vmul.f32 %v166, 0.6931472
    %v168 = vsel %vm138, %v167, -18.420681
    %v169 = vsel %vm147, %v128, -inf
    %170 = vmax.xlane.f32.xlu0 %v169
    %v171 = vpop.xlane.xlu0 %170
    %v172 = vsub.f32 %v128, %v171
    %v173 = vmul.f32 %v172, 1.442695
    %v174 = vpow.pop %v173
    %v175 = vsel %vm147, %v174, 0.0
    %176 = vadd.xlane.f32.xlu0 %v175
    %v177 = vpop.xlane.xlu0 %176
    %v178 = vlog2.pop %v177
    %v179 = vmul.f32 %v178, 0.6931472
    %v180 = vsub.f32 %v172, %v179
    %v181 = vrcp.pop %v177
    %v182 = vmul.f32 %v177, %v181
    %v183 = vsub.f32 1.0, %v182
    %v184 = vmul.f32 %v181, %v183
    %v185 = vadd.f32 %v181, %v184
    %vm186 = vweird.f32 %v177
    %vm187 = vweird.f32 %v181
    %vm188 = vmor %vm186, %vm187
    %v189 = vsel %vm188, %v181, %v185
    %v190 = vand.u32 2147483647, %v177
    %vm191 = vcmp.eq.f32.partialorder %v190, 8.507059e+37
    %v192 = vand.u32 %v177, 2147483648
    %v193 = vor.u32 1.1754944e-38, %v192
    %v194 = vsel %vm191, %v193, %v189
    %v195 = vmul.f32 %v174, %v194
    %v196 = vsub.f32 %v180, %v168
    %v197 = vmul.f32 %v195, %v196
    %v198 = vsel %vm147, %v197, 0.0
    %199 = vadd.xlane.f32.xlu0 %v198
    %v200 = vpop.xlane.xlu0 %199
    %v201 = vrot.slane %v200, 4
    %v202 = vadd.f32 %v200, %v201
    %v203 = vrot.slane %v202, 2
    %v204 = vadd.f32 %v202, %v203
    %v205 = vrot.slane %v204, 1
    %v206 = vadd.f32 %v204, %v205
    %v207 = vsel %vm147, %v129, -inf
    %208 = vmax.xlane.f32.xlu0 %v207
    %v209 = vpop.xlane.xlu0 %208
    %v210 = vsub.f32 %v129, %v209
    %v211 = vmul.f32 %v210, 1.442695
    %v212 = vpow.pop %v211
    %v213 = vsel %vm147, %v212, 0.0
    %214 = vadd.xlane.f32.xlu0 %v213
    %v215 = vpop.xlane.xlu0 %214
    %v216 = vlog2.pop %v215
    %v217 = vmul.f32 %v216, 0.6931472
    %v218 = vsub.f32 %v210, %v217
    %v219 = vrcp.pop %v215
    %v220 = vmul.f32 %v215, %v219
    %v221 = vsub.f32 1.0, %v220
    %v222 = vmul.f32 %v219, %v221
    %v223 = vadd.f32 %v219, %v222
    %vm224 = vweird.f32 %v215
    %vm225 = vweird.f32 %v219
    %vm226 = vmor %vm224, %vm225
    %v227 = vsel %vm226, %v219, %v223
    %v228 = vand.u32 2147483647, %v215
    %vm229 = vcmp.eq.f32.partialorder %v228, 8.507059e+37
    %v230 = vand.u32 %v215, 2147483648
    %v231 = vor.u32 1.1754944e-38, %v230
    %v232 = vsel %vm229, %v231, %v227
    %v233 = vmul.f32 %v212, %v232
    %v234 = vsub.f32 %v218, %v168
    %v235 = vmul.f32 %v233, %v234
    %v236 = vsel %vm147, %v235, 0.0
    %237 = vadd.xlane.f32.xlu0 %v236
    %v238 = vpop.xlane.xlu0 %237
    %v239 = vrot.slane %v238, 4
    %v240 = vadd.f32 %v238, %v239
    %v241 = vrot.slane %v240, 2
    %v242 = vadd.f32 %v240, %v241
    %v243 = vrot.slane %v242, 1
    %v244 = vadd.f32 %v242, %v243
    %v245 = vsel %vm138, %v112, 0.0
    %v246 = vsel %vm147, %v245, 0.0
    %247 = vadd.xlane.f32.xlu0 %v246
    %v248 = vpop.xlane.xlu0 %247
    %v249 = vrot.slane %v248, 4
    %v250 = vadd.f32 %v248, %v249
    %v251 = vrot.slane %v250, 2
    %v252 = vadd.f32 %v250, %v251
    %v253 = vrot.slane %v252, 1
    %v254 = vadd.f32 %v252, %v253
    %v255 = vsel %vm147, %v112, 0.0
    %256 = vadd.xlane.f32.xlu0 %v255
    %v257 = vpop.xlane.xlu0 %256
    %v258 = vrot.slane %v257, 4
    %v259 = vadd.f32 %v257, %v258
    %v260 = vrot.slane %v259, 2
    %v261 = vadd.f32 %v259, %v260
    %v262 = vrot.slane %v261, 1
    %v263 = vadd.f32 %v261, %v262
    %v264 = vsel %vm147, %v140, 0.0
    %265 = vadd.xlane.f32.xlu0 %v264
    %v266 = vpop.xlane.xlu0 %265
    %v267 = vrot.slane %v266, 4
    %v268 = vadd.f32 %v266, %v267
    %v269 = vrot.slane %v268, 2
    %v270 = vadd.f32 %v268, %v269
    %v271 = vrot.slane %v270, 1
    %v272 = vadd.f32 %v270, %v271
    %v273 = vlaneseq
    %v274 = vand.u32 %v273, 127
    %vm275 = vcmp.eq.s32.totalorder %v274, 0
    %v276 = vsel %vm275, %v206, 0.0
    %vm277 = vcmp.eq.s32.totalorder %v274, 1
    %v278 = vsel %vm277, %v244, 0.0
    %v279 = vadd.f32 %v276, %v278
    %vm280 = vcmp.eq.s32.totalorder %v274, 2
    %v281 = vsel %vm280, %v254, 0.0
    %v282 = vadd.f32 %v279, %v281
    %vm283 = vcmp.eq.s32.totalorder %v274, 3
    %v284 = vsel %vm283, %v263, 0.0
    %v285 = vadd.f32 %v282, %v284
    %vm286 = vcmp.eq.s32.totalorder %v274, 4
    %v287 = vsel %vm286, %v272, 0.0
    %v288 = vadd.f32 %v285, %v287
    %289 = vst [vmem:[#allocation5] sm:$0xff] %v288
    // Predicated region
    $region22: #{tpu_custom_call.1} parent=1 // pred_check
      _
    $region23: #{tpu_custom_call.1} parent=1 // pred_check_branch
      %291 = sbr.rel (0) target = $region25
    $region24: #{tpu_custom_call.1} parent=1 // pred_region
      %293 = vsyncadd [#allocation4], 0
      %s295 = sshll.u32 [#allocation5], 4
      %s296 = int_to_ptr.vmem [resolvable:$true] %s295
      %s297 = sshll.u32 %s4, 4
      %s298 = int_to_ptr.hbm [resolvable:$true] %s297
      %300 = dma.vmem_to_hbm [thread:$0]  %s296, 128, %s298, [#allocation4]
    $region25: #{tpu_custom_call.1} parent=1 // pred_fallthru
      _
    // Predicated region
    $region26: #{tpu_custom_call.1} parent=1 // pred_check
      _
    $region27: #{tpu_custom_call.1} parent=1 // pred_check_branch
      %302 = sbr.rel (0) target = $region29
    $region28: #{tpu_custom_call.1} parent=1 // pred_region
      %304 = dma.done [#allocation4], 128
    $region29: #{tpu_custom_call.1} parent=1 // pred_fallthru
      _
    %305 = vsyncpa [#allocation3], 1
    %306 = vsyncpa [#allocation4], 1

</llo_original>
